<compile_context>
chip_gen: v7x
topology: tpu7x:2x2x1
jax: 0.10.0
libtpu: 0.0.40
codegen_flags: <defaults>
</compile_context>

<pallas_src>
import functools

import jax
import jax.numpy as jnp
from jax.experimental import pallas as pl
from jax.experimental.pallas import tpu as pltpu

BN_EPS = 1e-5                    # nn.BatchNorm1d default eps
LANE = 128


# ------------------------------ hardware query --------------------------------

@functools.lru_cache(maxsize=1)
def _hw():
    """(vmem_capacity_bytes, tensorcores_per_chip) with conservative fallbacks."""
    vmem_cap = 64 << 20          # conservative default: v7x per-core VMEM
    cores = 1                    # conservative default: no N-axis split
    try:
        info = pltpu.get_tpu_info()
        vmem_cap = int(getattr(info, "vmem_capacity_bytes", vmem_cap)) or vmem_cap
        for name in ("num_cores", "tensorcores_per_chip", "cores_per_chip"):
            v = getattr(info, name, None)
            if v:
                cores = int(v)
                break
    except Exception:
        pass
    try:
        kind = jax.devices()[0].device_kind.lower()
        if ("v4" in kind) or ("v5p" in kind) or ("v7" in kind):
            cores = max(cores, 2)
    except Exception:
        pass
    return vmem_cap, max(1, min(cores, 2))


# ------------------------------ small helpers ---------------------------------

def _round_up(n, m=LANE):
    return ((n + m - 1) // m) * m


def _pad_cols(a, n_to):
    return a if a.shape[1] == n_to else jnp.pad(a, ((0, 0), (0, n_to - a.shape[1])))


def _pick_tile(dim, target):
    """Largest multiple of 128 <= target that divides dim (dim is a multiple of 128)."""
    if dim <= LANE:
        return dim
    t = max(LANE, (min(target, dim) // LANE) * LANE)
    while dim % t:
        t -= LANE
    return t


def _block_spec(shape, index_map, buffers=None):
    """BlockSpec with optional explicit buffer depth; falls back cleanly if the running
    Pallas version does not accept pipeline_mode."""
    if buffers is not None:
        try:
            return pl.BlockSpec(shape, index_map, pipeline_mode=pl.Buffered(buffers))
        except Exception:
            pass
    return pl.BlockSpec(shape, index_map)


# --------------------------- gridded matmul kernel -----------------------------
# Grid = (N_tiles, K_tiles), reduction axis (K) last.  When the output dtype is f32 the
# accumulation goes directly into the VMEM-resident output block (its block index is
# constant across K); for bf16 outputs an f32 scratch accumulator is used.

def _mm_kernel(*refs, mode, eps, n_extra, use_scratch):
    x_ref, w_ref = refs[0], refs[1]
    extras = refs[2:2 + n_extra]
    o_ref = refs[2 + n_extra]
    acc_ref = refs[3 + n_extra] if use_scratch else o_ref

    k = pl.program_id(1)

    @pl.when(k == 0)
    def _():
        acc_ref[...] = jnp.zeros_like(acc_ref)

    acc_ref[...] += jnp.dot(x_ref[...], w_ref[...], preferred_element_type=jnp.float32)

    if use_scratch or mode != "plain":
        @pl.when(k == pl.num_programs(1) - 1)
        def _():
            y = acc_ref[...]
            if mode == "bias":
                y = y + extras[0][...]
            elif mode == "bn_relu":
                mu = jnp.mean(y, axis=0, keepdims=True)                      # batch stats
                var = jnp.mean(jnp.square(y - mu), axis=0, keepdims=True)    # biased var
                y = (y - mu) * jax.lax.rsqrt(var + eps)
                y = jnp.maximum(y * extras[0][...] + extras[1][...], 0.0)
            o_ref[...] = y.astype(o_ref.dtype)


def gridded_linear(x, w, *, bias=None, gamma=None, beta=None, mode="plain",
                   out_dtype=jnp.float32, tn_target=None, tk_target=2048, eps=BN_EPS):
    """y = x @ w (+bias | fused BN(batch stats)+ReLU).
    x:(M,K) bf16, w:(K,N) bf16 with K,N multiples of 128.  The full batch M stays in one
    block (required for the fused BatchNorm statistics)."""
    M, K = x.shape
    Kw, N = w.shape
    assert K == Kw and K % LANE == 0 and N % LANE == 0
    vmem_cap, n_tc = _hw()
    out_dtype = jnp.dtype(out_dtype)
    use_scratch = out_dtype != jnp.dtype(jnp.float32)

    # Split the "parallel" N axis only on chips with >1 TensorCore; on 1-TC v5e/v6e extra
    # N tiles are pure per-grid-step overhead.  Large K tiles amortize step overhead and
    # issue roofline-friendly weight DMAs.
    if tn_target is None:
        tn_target = N if n_tc <= 1 else max(LANE, N // n_tc)
    tn = _pick_tile(N, tn_target)
    tk = _pick_tile(K, tk_target)

    out_isz = out_dtype.itemsize

    def est(tk_, tn_):
        return (2 * M * tk_ * x.dtype.itemsize           # double-buffered x tiles
                + 2 * tk_ * tn_ * w.dtype.itemsize       # double-buffered w tiles
                + 2 * M * tn_ * out_isz                  # output tiles
                + (M * tn_ * 4 if use_scratch else 0)    # f32 accumulator scratch
                + 4 * 2 * tn_ * 4)                       # bias / gamma / beta vectors

    budget = (vmem_cap * 3) // 5                         # keep working set inside VMEM
    while est(tk, tn) > budget and tk > LANE:
        tk = _pick_tile(K, max(LANE, tk // 2))
    while est(tk, tn) > budget and tn > LANE:
        tn = _pick_tile(N, max(LANE, tn // 2))

    grid = (N // tn, K // tk)

    x_spec = pl.BlockSpec((M, tk), lambda j, k: (0, k))
    w_spec = pl.BlockSpec((tk, tn), lambda j, k: (k, j))
    v_spec = pl.BlockSpec((1, tn), lambda j, k: (0, j))
    out_spec = pl.BlockSpec((M, tn), lambda j, k: (0, j))

    if mode == "bias":
        extras, extra_specs = (bias,), (v_spec,)
    elif mode == "bn_relu":
        extras, extra_specs = (gamma, beta), (v_spec, v_spec)
    else:
        extras, extra_specs = (), ()

    kernel = functools.partial(_mm_kernel, mode=mode, eps=eps,
                               n_extra=len(extras), use_scratch=use_scratch)
    scratch = [pltpu.VMEM((M, tn), jnp.float32)] if use_scratch else []

    vmem_limit = min(max(16 << 20, int(est(tk, tn) * 1.5) + (2 << 20)),
                     (vmem_cap * 3) // 4)

    return pl.pallas_call(
        kernel,
        out_shape=jax.ShapeDtypeStruct((M, N), out_dtype),
        grid_spec=pltpu.PrefetchScalarGridSpec(
            num_scalar_prefetch=0,
            grid=grid,
            in_specs=[x_spec, w_spec, *extra_specs],
            out_specs=out_spec,
            scratch_shapes=scratch,
        ),
        compiler_params=pltpu.CompilerParams(
            dimension_semantics=("parallel", "arbitrary"),
            vmem_limit_bytes=vmem_limit),
    )(x, w, *extras)


# ---------------------- fully fused projection-MLP kernel ----------------------

def _fused_mlp_kernel(x_ref, *refs, num_layers, eps):
    """Whole projection MLP in one launch; all weights resident in VMEM.
    refs = (w_0..w_{L-1}, gamma_0, beta_0, ..., gamma_{L-2}, beta_{L-2}, out_ref)."""
    w_refs = refs[:num_layers]
    gb_refs = refs[num_layers:num_layers + 2 * (num_layers - 1)]
    o_ref = refs[-1]

    h = x_ref[...]                                   # bf16 activations
    for i in range(num_layers):
        y = jnp.dot(h, w_refs[i][...], preferred_element_type=jnp.float32)
        if i < num_layers - 1:
            mu = jnp.mean(y, axis=0, keepdims=True)                      # batch stats
            var = jnp.mean(jnp.square(y - mu), axis=0, keepdims=True)    # biased var
            y = (y - mu) * jax.lax.rsqrt(var + eps)
            y = y * gb_refs[2 * i][...] + gb_refs[2 * i + 1][...]
            h = jnp.maximum(y, 0.0).astype(jnp.bfloat16)
        else:
            o_ref[...] = y.astype(o_ref.dtype)


def fused_mlp(h, w_list, gamma_list, beta_list, *, eps=BN_EPS):
    """h:(B,Kp) bf16; w_list[i]:(Kp_i,Np_i) bf16; gamma/beta:(1,Np_i) f32.
    Returns (B, Np_last) f32 (caller slices off lane padding)."""
    B = h.shape[0]
    num_layers = len(w_list)
    n_out = w_list[-1].shape[1]
    vmem_cap, _ = _hw()

    # grid=(1,): single-buffer the big operands (a one-iteration pipeline gains nothing
    # from double buffering) -> halves resident VMEM for the weight stack.
    inputs = [h] + list(w_list)
    in_specs = [_block_spec(h.shape, lambda i: (0, 0), buffers=1)]
    in_specs += [_block_spec(w.shape, lambda i: (0, 0), buffers=1) for w in w_list]
    for g, b in zip(gamma_list, beta_list):
        inputs += [g, b]
        in_specs += [pl.BlockSpec(g.shape, lambda i: (0, 0)),
                     pl.BlockSpec(b.shape, lambda i: (0, 0))]

    in_bytes = sum(int(a.size) * a.dtype.itemsize for a in inputs)
    # Factor 2 covers the (unlikely) fallback where Buffered(1) is unavailable and the
    # inputs end up double-buffered anyway.
    vmem = 2 * in_bytes + 2 * B * n_out * 4
    vmem_limit = min(max(16 << 20, vmem + (4 << 20)), (vmem_cap * 3) // 4)

    kernel = functools.partial(_fused_mlp_kernel, num_layers=num_layers, eps=eps)
    return pl.pallas_call(
        kernel,
        out_shape=jax.ShapeDtypeStruct((B, n_out), jnp.float32),
        grid_spec=pltpu.PrefetchScalarGridSpec(
            num_scalar_prefetch=0,
            grid=(1,),
            in_specs=in_specs,
            out_specs=pl.BlockSpec((B, n_out), lambda i: (0, 0)),
        ),
        compiler_params=pltpu.CompilerParams(
            dimension_semantics=("arbitrary",),
            vmem_limit_bytes=vmem_limit),
    )(*inputs)


# ------------------------------ Projector forward ------------------------------

def _conv_prepool(x):
    """NCHW, k=2, s=2:  Conv2d -> AdaptiveAvgPool2d((1,1)) -> Flatten
    ==  spatial_mean(2x2 patches) @ W_mat + b.
    Returns (B, C*4) with patch elements flattened in (C, kh, kw) order to match
    PyTorch's (out, in, kh, kw) weight layout."""
    B, C, H, W = x.shape
    assert H % 2 == 0 and W % 2 == 0
    p = x.reshape(B, C, H // 2, 2, W // 2, 2)
    return jnp.mean(p, axis=(2, 4)).reshape(B, C * 4)


def projector_forward(x, kparams, input_dim, projection_dims):
    kp_in = kparams["w"][0].shape[0]
    if input_dim == 1024:
        pooled = _conv_prepool(x).astype(jnp.bfloat16)
        # Weight-bound 4096x2048 matmul; emit bf16 directly to feed the MLP.
        h = gridded_linear(pooled, kparams["conv_w"], bias=kparams["conv_b"],
                           mode="bias", out_dtype=jnp.bfloat16)
    else:
        h = x.astype(jnp.bfloat16)
    hb = _pad_cols(h, kp_in)

    if kparams["fused"]:
        out = fused_mlp(hb, kparams["w"], kparams["gamma"], kparams["beta"])
    else:
        # Per-layer gridded fallback when the weight stack exceeds the VMEM budget.
        n_hidden = len(projection_dims) - 2
        for i in range(n_hidden):
            hb = gridded_linear(hb, kparams["w"][i], gamma=kparams["gamma"][i],
                                beta=kparams["beta"][i], mode="bn_relu",
                                out_dtype=jnp.bfloat16)      # bf16 writeback, no extra cast
        out = gridded_linear(hb, kparams["w"][n_hidden], mode="plain",
                             out_dtype=jnp.float32)
    return out[:, :projection_dims[-1]]


# ------------------- deterministic params + one-time kernel prep ----------------

def init_params(key, input_dim, projection_dims):
    """PyTorch-layout f32 parameters (the reference consumes these directly)."""
    params = {"w": [], "gamma": [], "beta": []}
    if input_dim == 1024:
        key, k1, k2 = jax.random.split(key, 3)
        params["conv_w"] = jax.random.normal(k1, (2048, 1024, 2, 2), jnp.float32) * (4096 ** -0.5)
        params["conv_b"] = jax.random.normal(k2, (2048,), jnp.float32) * 0.01
    n_layers = len(projection_dims) - 1
    for i in range(n_layers):
        key, kw = jax.random.split(key)
        fan_in, fan_out = projection_dims[i], projection_dims[i + 1]
        params["w"].append(jax.random.normal(kw, (fan_out, fan_in), jnp.float32) * (fan_in ** -0.5))
        if i < n_layers - 1:                         # hidden layers carry BatchNorm1d
            params["gamma"].append(jnp.ones((fan_out,), jnp.float32))
            params["beta"].append(jnp.zeros((fan_out,), jnp.float32))
    return params


def prepare_params(params, input_dim, projection_dims, fused_weight_budget=None):
    """One-time layout + dtype prep: transpose to (in,out), zero-pad feature dims to
    multiples of 128 (lane-dense stores / MXU tiles), cast weights to bf16 ONCE.
    The single-launch fused MLP is used when the padded bf16 weight stack fits the
    generation-aware VMEM budget (~VMEM capacity / 4: ~32 MiB v5e/v6e, ~16 MiB v7x)."""
    vmem_cap, _ = _hw()
    if fused_weight_budget is None:
        fused_weight_budget = vmem_cap // 4

    kp = {}
    if input_dim == 1024:
        w_flat = params["conv_w"].reshape(2048, 4096)          # (out, in*kh*kw)
        kp["conv_w"] = jnp.asarray(w_flat.T, jnp.bfloat16)     # (4096, 2048)
        kp["conv_b"] = params["conv_b"].reshape(1, -1).astype(jnp.float32)

    n_layers = len(projection_dims) - 1
    ws, gs, bs = [], [], []
    wbytes = 0
    for i in range(n_layers):
        kin, nout = projection_dims[i], projection_dims[i + 1]
        kp_in, np_out = _round_up(kin), _round_up(nout)
        wt = jnp.zeros((kp_in, np_out), jnp.float32).at[:kin, :nout].set(params["w"][i].T)
        ws.append(wt.astype(jnp.bfloat16))
        wbytes += kp_in * np_out * 2
        if i < n_layers - 1:
            g = jnp.ones((1, np_out), jnp.float32).at[0, :nout].set(params["gamma"][i])
            b = jnp.zeros((1, np_out), jnp.float32).at[0, :nout].set(params["beta"][i])
            gs.append(g)
            bs.append(b)
    kp["w"], kp["gamma"], kp["beta"] = ws, gs, bs
    kp["fused"] = wbytes <= fused_weight_budget
    return kp


# ------------------------------ pure-JAX reference ------------------------------

def ref_forward(x, params, input_dim, projection_dims, eps=BN_EPS):
    if input_dim == 1024:
        # Real convolution + adaptive pool: validates the pool-then-matmul rewrite.
        y = jax.lax.conv_general_dilated(
            x, params["conv_w"], window_strides=(2, 2), padding="VALID",
            dimension_numbers=("NCHW", "OIHW", "NCHW"))
        y = y + params["conv_b"][None, :, None, None]
        h = jnp.mean(y, axis=(2, 3))                  # AdaptiveAvgPool2d((1,1)) + Flatten
    else:
        h = x
    n_hidden = len(projection_dims) - 2
    for i in range(n_hidden):
        y = h @ params["w"][i].T
        mu = jnp.mean(y, axis=0, keepdims=True)
        var = jnp.mean((y - mu) ** 2, axis=0, keepdims=True)
        y = (y - mu) / jnp.sqrt(var + eps)
        y = y * params["gamma"][i] + params["beta"][i]
        h = jnp.maximum(y, 0.0)
    return h @ params["w"][n_hidden].T


# -------------------------------------- demo ------------------------------------

if __name__ == "__main__":
    root = jax.random.PRNGKey(0)
    ka_p, ka_x, kb_p, kb_x, kc_p, kc_x = jax.random.split(root, 6)
    # Tolerances account for bf16 weight/activation quantization vs. the f32 reference.
    TOL = dict(atol=5e-2, rtol=5e-2)

    # Case A: plain-MLP path (input_dim != 1024), tiny dims -> single fused-MLP launch.
    dims_a = (32, 64, 64, 16)
    params_a = init_params(ka_p, 32, dims_a)
    kparams_a = prepare_params(params_a, 32, dims_a)
    assert kparams_a["fused"]
    x_a = jax.random.normal(ka_x, (8, 32), jnp.float32)
    out_a = projector_forward(x_a, kparams_a, 32, dims_a)
    jax.block_until_ready(out_a)
    ref_a = ref_forward(x_a, params_a, 32, dims_a)
    assert out_a.shape == (8, dims_a[-1])
    assert jnp.allclose(out_a, ref_a, **TOL), "MLP (fused) path mismatch"

    # Case B: conv path (input_dim == 1024): gridded conv-matmul + fused-MLP projection,
    # checked against a real lax.conv + adaptive pooling reference.
    dims_b = (2048, 128, 64)
    params_b = init_params(kb_p, 1024, dims_b)
    kparams_b = prepare_params(params_b, 1024, dims_b)
    assert kparams_b["fused"]
    x_b = jax.random.normal(kb_x, (8, 1024, 4, 4), jnp.float32)
    out_b = projector_forward(x_b, kparams_b, 1024, dims_b)
    jax.block_until_ready(out_b)
    ref_b = ref_forward(x_b, params_b, 1024, dims_b)
    assert out_b.shape == (8, dims_b[-1])
    assert jnp.allclose(out_b, ref_b, **TOL), "Conv path mismatch"

    # Case C: force the per-layer gridded fallback (budget=0) to exercise the BN+ReLU
    # (bf16 writeback, scratch accumulator) and plain (in-place f32 accumulation) variants.
    dims_c = (1536, 2048, 128)
    params_c = init_params(kc_p, 1536, dims_c)
    kparams_c = prepare_params(params_c, 1536, dims_c, fused_weight_budget=0)
    assert not kparams_c["fused"]
    x_c = jax.random.normal(kc_x, (8, 1536), jnp.float32)
    out_c = projector_forward(x_c, kparams_c, 1536, dims_c)
    jax.block_until_ready(out_c)
    ref_c = ref_forward(x_c, params_c, 1536, dims_c)
    assert out_c.shape == (8, dims_c[-1])
    assert jnp.allclose(out_c, ref_c, **TOL), "Gridded fallback mismatch"

    print("KERNEL_OK")
</pallas_src>

<mosaic_0001>
module attributes {stable_mosaic.version = 11 : i64} {
  func.func @_fused_mlp_kernel(%arg0: i32, %arg1: memref<8x128xbf16, #tpu.memory_space<vmem>>, %arg2: memref<128x128xbf16, #tpu.memory_space<vmem>>, %arg3: memref<128x128xbf16, #tpu.memory_space<vmem>>, %arg4: memref<128x128xbf16, #tpu.memory_space<vmem>>, %arg5: memref<1x128xf32, #tpu.memory_space<vmem>>, %arg6: memref<1x128xf32, #tpu.memory_space<vmem>>, %arg7: memref<1x128xf32, #tpu.memory_space<vmem>>, %arg8: memref<1x128xf32, #tpu.memory_space<vmem>>, %arg9: memref<8x128xf32, #tpu.memory_space<vmem>>) attributes {dimension_semantics = [#tpu.dimension_semantics<arbitrary>], iteration_bounds = array<i64: 1>, scalar_prefetch = 0 : i64, scratch_operands = 0 : i64, tpu.core_type = #tpu.core_type<tc>, window_params = [{pipeline_mode = #tpu.pipeline_mode<synchronous>, transform_indices = @transform_0, window_bounds = array<i64: 8, 128>}, {pipeline_mode = #tpu.pipeline_mode<synchronous>, transform_indices = @transform_1, window_bounds = array<i64: 128, 128>}, {pipeline_mode = #tpu.pipeline_mode<synchronous>, transform_indices = @transform_2, window_bounds = array<i64: 128, 128>}, {pipeline_mode = #tpu.pipeline_mode<synchronous>, transform_indices = @transform_3, window_bounds = array<i64: 128, 128>}, {pipeline_mode = #tpu.pipeline_mode<synchronous>, transform_indices = @transform_4, window_bounds = array<i64: 1, 128>}, {pipeline_mode = #tpu.pipeline_mode<synchronous>, transform_indices = @transform_5, window_bounds = array<i64: 1, 128>}, {pipeline_mode = #tpu.pipeline_mode<synchronous>, transform_indices = @transform_6, window_bounds = array<i64: 1, 128>}, {pipeline_mode = #tpu.pipeline_mode<synchronous>, transform_indices = @transform_7, window_bounds = array<i64: 1, 128>}, {pipeline_mode = #tpu.pipeline_mode<synchronous>, transform_indices = @transform_8, window_bounds = array<i64: 8, 128>}]} {
    %c0 = arith.constant 0 : index
    %c0_0 = arith.constant 0 : index
    %0 = vector.load %arg1[%c0, %c0_0] : memref<8x128xbf16, #tpu.memory_space<vmem>>, vector<8x128xbf16>
    %c0_1 = arith.constant 0 : index
    %c0_2 = arith.constant 0 : index
    %1 = vector.load %arg2[%c0_1, %c0_2] : memref<128x128xbf16, #tpu.memory_space<vmem>>, vector<128x128xbf16>
    %cst = arith.constant dense<0.000000e+00> : vector<8x128xf32>
    %2 = tpu.matmul %0, %1, %cst {dimension_numbers = #tpu.dot_dimension_numbers<[1], [0], [0], [1], [0, 0, 1, 1], [], []>} : vector<8x128xbf16>, vector<128x128xbf16>, vector<8x128xf32> -> vector<8x128xf32>
    %cst_3 = arith.constant dense<0.000000e+00> : vector<128xf32>
    %3 = vector.multi_reduction <add>, %2, %cst_3 [0] : vector<8x128xf32> to vector<128xf32>
    %4 = vector.shape_cast %3 : vector<128xf32> to vector<1x128xf32>
    %cst_4 = arith.constant 8.000000e+00 : f32
    %5 = vector.broadcast %cst_4 : f32 to vector<1x128xf32>
    %6 = arith.divf %4, %5 : vector<1x128xf32>
    %7 = vector.broadcast %6 : vector<1x128xf32> to vector<8x128xf32>
    %8 = arith.subf %2, %7 : vector<8x128xf32>
    %9 = arith.mulf %8, %8 : vector<8x128xf32>
    %cst_5 = arith.constant dense<0.000000e+00> : vector<128xf32>
    %10 = vector.multi_reduction <add>, %9, %cst_5 [0] : vector<8x128xf32> to vector<128xf32>
    %11 = vector.shape_cast %10 : vector<128xf32> to vector<1x128xf32>
    %cst_6 = arith.constant 8.000000e+00 : f32
    %12 = vector.broadcast %cst_6 : f32 to vector<1x128xf32>
    %13 = arith.divf %11, %12 : vector<1x128xf32>
    %14 = vector.broadcast %6 : vector<1x128xf32> to vector<8x128xf32>
    %15 = arith.subf %2, %14 : vector<8x128xf32>
    %cst_7 = arith.constant 9.99999974E-6 : f32
    %16 = vector.broadcast %cst_7 : f32 to vector<1x128xf32>
    %17 = arith.addf %13, %16 : vector<1x128xf32>
    %18 = math.rsqrt %17 : vector<1x128xf32>
    %19 = vector.broadcast %18 : vector<1x128xf32> to vector<8x128xf32>
    %20 = arith.mulf %15, %19 : vector<8x128xf32>
    %c0_8 = arith.constant 0 : index
    %c0_9 = arith.constant 0 : index
    %21 = vector.load %arg5[%c0_8, %c0_9] : memref<1x128xf32, #tpu.memory_space<vmem>>, vector<1x128xf32>
    %22 = vector.broadcast %21 : vector<1x128xf32> to vector<8x128xf32>
    %23 = arith.mulf %20, %22 : vector<8x128xf32>
    %c0_10 = arith.constant 0 : index
    %c0_11 = arith.constant 0 : index
    %24 = vector.load %arg6[%c0_10, %c0_11] : memref<1x128xf32, #tpu.memory_space<vmem>>, vector<1x128xf32>
    %25 = vector.broadcast %24 : vector<1x128xf32> to vector<8x128xf32>
    %26 = arith.addf %23, %25 : vector<8x128xf32>
    %cst_12 = arith.constant 0.000000e+00 : f32
    %27 = vector.broadcast %cst_12 : f32 to vector<8x128xf32>
    %28 = arith.maximumf %26, %27 : vector<8x128xf32>
    %29 = arith.truncf %28 : vector<8x128xf32> to vector<8x128xbf16>
    %c0_13 = arith.constant 0 : index
    %c0_14 = arith.constant 0 : index
    %30 = vector.load %arg3[%c0_13, %c0_14] : memref<128x128xbf16, #tpu.memory_space<vmem>>, vector<128x128xbf16>
    %cst_15 = arith.constant dense<0.000000e+00> : vector<8x128xf32>
    %31 = tpu.matmul %29, %30, %cst_15 {dimension_numbers = #tpu.dot_dimension_numbers<[1], [0], [0], [1], [0, 0, 1, 1], [], []>} : vector<8x128xbf16>, vector<128x128xbf16>, vector<8x128xf32> -> vector<8x128xf32>
    %cst_16 = arith.constant dense<0.000000e+00> : vector<128xf32>
    %32 = vector.multi_reduction <add>, %31, %cst_16 [0] : vector<8x128xf32> to vector<128xf32>
    %33 = vector.shape_cast %32 : vector<128xf32> to vector<1x128xf32>
    %cst_17 = arith.constant 8.000000e+00 : f32
    %34 = vector.broadcast %cst_17 : f32 to vector<1x128xf32>
    %35 = arith.divf %33, %34 : vector<1x128xf32>
    %36 = vector.broadcast %35 : vector<1x128xf32> to vector<8x128xf32>
    %37 = arith.subf %31, %36 : vector<8x128xf32>
    %38 = arith.mulf %37, %37 : vector<8x128xf32>
    %cst_18 = arith.constant dense<0.000000e+00> : vector<128xf32>
    %39 = vector.multi_reduction <add>, %38, %cst_18 [0] : vector<8x128xf32> to vector<128xf32>
    %40 = vector.shape_cast %39 : vector<128xf32> to vector<1x128xf32>
    %cst_19 = arith.constant 8.000000e+00 : f32
    %41 = vector.broadcast %cst_19 : f32 to vector<1x128xf32>
    %42 = arith.divf %40, %41 : vector<1x128xf32>
    %43 = vector.broadcast %35 : vector<1x128xf32> to vector<8x128xf32>
    %44 = arith.subf %31, %43 : vector<8x128xf32>
    %cst_20 = arith.constant 9.99999974E-6 : f32
    %45 = vector.broadcast %cst_20 : f32 to vector<1x128xf32>
    %46 = arith.addf %42, %45 : vector<1x128xf32>
    %47 = math.rsqrt %46 : vector<1x128xf32>
    %48 = vector.broadcast %47 : vector<1x128xf32> to vector<8x128xf32>
    %49 = arith.mulf %44, %48 : vector<8x128xf32>
    %c0_21 = arith.constant 0 : index
    %c0_22 = arith.constant 0 : index
    %50 = vector.load %arg7[%c0_21, %c0_22] : memref<1x128xf32, #tpu.memory_space<vmem>>, vector<1x128xf32>
    %51 = vector.broadcast %50 : vector<1x128xf32> to vector<8x128xf32>
    %52 = arith.mulf %49, %51 : vector<8x128xf32>
    %c0_23 = arith.constant 0 : index
    %c0_24 = arith.constant 0 : index
    %53 = vector.load %arg8[%c0_23, %c0_24] : memref<1x128xf32, #tpu.memory_space<vmem>>, vector<1x128xf32>
    %54 = vector.broadcast %53 : vector<1x128xf32> to vector<8x128xf32>
    %55 = arith.addf %52, %54 : vector<8x128xf32>
    %cst_25 = arith.constant 0.000000e+00 : f32
    %56 = vector.broadcast %cst_25 : f32 to vector<8x128xf32>
    %57 = arith.maximumf %55, %56 : vector<8x128xf32>
    %58 = arith.truncf %57 : vector<8x128xf32> to vector<8x128xbf16>
    %c0_26 = arith.constant 0 : index
    %c0_27 = arith.constant 0 : index
    %59 = vector.load %arg4[%c0_26, %c0_27] : memref<128x128xbf16, #tpu.memory_space<vmem>>, vector<128x128xbf16>
    %cst_28 = arith.constant dense<0.000000e+00> : vector<8x128xf32>
    %60 = tpu.matmul %58, %59, %cst_28 {dimension_numbers = #tpu.dot_dimension_numbers<[1], [0], [0], [1], [0, 0, 1, 1], [], []>} : vector<8x128xbf16>, vector<128x128xbf16>, vector<8x128xf32> -> vector<8x128xf32>
    %c0_29 = arith.constant 0 : index
    %c0_30 = arith.constant 0 : index
    %61 = vector.load %arg9[%c0_29, %c0_30] : memref<8x128xf32, #tpu.memory_space<vmem>>, vector<8x128xf32>
    tpu.vector_store %arg9[%c0_29, %c0_30], %60 {strides = array<i32>} : memref<8x128xf32, #tpu.memory_space<vmem>>, vector<8x128xf32>,
    return
  }
  func.func @transform_0(%arg0: i32) -> (i32, i32) {
    %c0_i32 = arith.constant 0 : i32
    %c0_i32_0 = arith.constant 0 : i32
    %c0_i32_1 = arith.constant 0 : i32
    return %c0_i32, %c0_i32_0 : i32, i32
  }
  func.func @transform_1(%arg0: i32) -> (i32, i32) {
    %c0_i32 = arith.constant 0 : i32
    %c0_i32_0 = arith.constant 0 : i32
    %c0_i32_1 = arith.constant 0 : i32
    return %c0_i32, %c0_i32_0 : i32, i32
  }
  func.func @transform_2(%arg0: i32) -> (i32, i32) {
    %c0_i32 = arith.constant 0 : i32
    %c0_i32_0 = arith.constant 0 : i32
    %c0_i32_1 = arith.constant 0 : i32
    return %c0_i32, %c0_i32_0 : i32, i32
  }
  func.func @transform_3(%arg0: i32) -> (i32, i32) {
    %c0_i32 = arith.constant 0 : i32
    %c0_i32_0 = arith.constant 0 : i32
    %c0_i32_1 = arith.constant 0 : i32
    return %c0_i32, %c0_i32_0 : i32, i32
  }
  func.func @transform_4(%arg0: i32) -> (i32, i32) {
    %c0_i32 = arith.constant 0 : i32
    %c0_i32_0 = arith.constant 0 : i32
    %c0_i32_1 = arith.constant 0 : i32
    return %c0_i32, %c0_i32_0 : i32, i32
  }
  func.func @transform_5(%arg0: i32) -> (i32, i32) {
    %c0_i32 = arith.constant 0 : i32
    %c0_i32_0 = arith.constant 0 : i32
    %c0_i32_1 = arith.constant 0 : i32
    return %c0_i32, %c0_i32_0 : i32, i32
  }
  func.func @transform_6(%arg0: i32) -> (i32, i32) {
    %c0_i32 = arith.constant 0 : i32
    %c0_i32_0 = arith.constant 0 : i32
    %c0_i32_1 = arith.constant 0 : i32
    return %c0_i32, %c0_i32_0 : i32, i32
  }
  func.func @transform_7(%arg0: i32) -> (i32, i32) {
    %c0_i32 = arith.constant 0 : i32
    %c0_i32_0 = arith.constant 0 : i32
    %c0_i32_1 = arith.constant 0 : i32
    return %c0_i32, %c0_i32_0 : i32, i32
  }
  func.func @transform_8(%arg0: i32) -> (i32, i32) {
    %c0_i32 = arith.constant 0 : i32
    %c0_i32_0 = arith.constant 0 : i32
    %c0_i32_1 = arith.constant 0 : i32
    return %c0_i32, %c0_i32_0 : i32, i32
  }
}

</mosaic_0001>

<llo_original>
// kernel: tpu_custom_call.1
$region0: #{tpu_custom_call.1}
  #allocation0 [shape = 'u32[]', space=smem, size = 0x4, offset = 0x4, fixed_abs, tag = 'smem constant byte address 0x4 - core index']
  #allocation1 [shape = 'u32[144,128]{1,0:T(1,128)}', space=vmem, size = 0x12000, scoped, tag = 'internal scratch']
  %s0 = inlined_call_operand.hbm [shape: bf16[8,128], index: 0, kind: input, shape index: {}]
  %s1 = inlined_call_operand.hbm [shape: bf16[128,128], index: 1, kind: input, shape index: {}]
  %s2 = inlined_call_operand.hbm [shape: bf16[128,128], index: 2, kind: input, shape index: {}]
  %s3 = inlined_call_operand.hbm [shape: bf16[128,128], index: 3, kind: input, shape index: {}]
  %s4 = inlined_call_operand.vmem [shape: f32[1,128], index: 4, kind: input, shape index: {}]
  %s5 = inlined_call_operand.vmem [shape: f32[1,128], index: 5, kind: input, shape index: {}]
  %s6 = inlined_call_operand.vmem [shape: f32[1,128], index: 6, kind: input, shape index: {}]
  %s7 = inlined_call_operand.vmem [shape: f32[1,128], index: 7, kind: input, shape index: {}]
  %s8 = inlined_call_operand.hbm [shape: f32[8,128], index: 8, kind: output, shape index: {}]
  %s9 = sld [smem:[#allocation0]]
  $region58: #{tpu_custom_call.1} parent=0
    _
  %s11 = ssub.s32 1, %s9
  %s12 = scalar_select 0, %s11, %s9
  $region1: #{tpu_custom_call.1} parent=0
    #allocation2 [shape = 'u8[2048]{0}', space=vmem, size = 0x800, scoped, tag = 'input window, operand 0, single buffered']
    #allocation3 [shape = 's32[1]{0}', space=sflag, size = 0x4, scoped, tag = 'scoped memory for tpu_custom_call.1']
    #allocation4 [shape = 's32[1]{0}', space=sflag, size = 0x4, scoped, tag = 'scoped memory for tpu_custom_call.1']
    #allocation5 [shape = 'u8[32768]{0}', space=vmem, size = 0x8000, scoped, tag = 'input window, operand 1, single buffered']
    #allocation6 [shape = 's32[1]{0}', space=sflag, size = 0x4, scoped, tag = 'scoped memory for tpu_custom_call.1']
    #allocation7 [shape = 'u8[32768]{0}', space=vmem, size = 0x8000, scoped, tag = 'input window, operand 2, single buffered']
    #allocation8 [shape = 'u8[32768]{0}', space=vmem, size = 0x8000, scoped, tag = 'input window, operand 3, single buffered']
    #allocation9 [shape = 's32[1]{0}', space=sflag, size = 0x4, scoped, tag = 'scoped memory for tpu_custom_call.1']
    #allocation10 [shape = 'u8[4096]{0}', space=vmem, size = 0x1000, scoped, tag = 'output window, operand 0, single buffered']
    %13 = vsyncpa [#allocation3], 0
    %14 = vsyncpa [#allocation6], 0
    %15 = vsyncpa [#allocation9], 0
    %16 = vsyncpa [#allocation4], 0
    // Predicated region
    $region2: #{tpu_custom_call.1} parent=1 // pred_check
      _
    $region3: #{tpu_custom_call.1} parent=1 // pred_check_branch
      %18 = sbr.rel (0) target = $region5
    $region4: #{tpu_custom_call.1} parent=1 // pred_region
      %s20 = ssub.s32 64, 64
      %21 = vsyncadd [#allocation3], %s20
      %s23 = sshll.u32 [#allocation2], 4
      %s24 = int_to_ptr.vmem [resolvable:$true] %s23
      %26 = dma.hbm_to_vmem [thread:$0]  %s0, 64, %s24, [#allocation3]
    $region5: #{tpu_custom_call.1} parent=1 // pred_fallthru
      _
    // Predicated region
    $region6: #{tpu_custom_call.1} parent=1 // pred_check
      _
    $region7: #{tpu_custom_call.1} parent=1 // pred_check_branch
      %28 = sbr.rel (0) target = $region9
    $region8: #{tpu_custom_call.1} parent=1 // pred_region
      %s30 = ssub.s32 1024, 1024
      %31 = vsyncadd [#allocation6], %s30
      %s32 = sshll.u32 [#allocation5], 4
      %s33 = int_to_ptr.vmem [resolvable:$true] %s32
      %38 = dma.hbm_to_vmem [thread:$0]  %s1, 1024, %s33, [#allocation6], 64, 64, 4
    $region9: #{tpu_custom_call.1} parent=1 // pred_fallthru
      _
    // Predicated region
    $region10: #{tpu_custom_call.1} parent=1 // pred_check
      _
    $region11: #{tpu_custom_call.1} parent=1 // pred_check_branch
      %40 = sbr.rel (0) target = $region13
    $region12: #{tpu_custom_call.1} parent=1 // pred_region
      %s42 = ssub.s32 1024, 1024
      %43 = vsyncadd [#allocation6], %s42
      %s44 = sshll.u32 [#allocation7], 4
      %s45 = int_to_ptr.vmem [resolvable:$true] %s44
      %50 = dma.hbm_to_vmem [thread:$0]  %s2, 1024, %s45, [#allocation6], 64, 64, 4
    $region13: #{tpu_custom_call.1} parent=1 // pred_fallthru
      _
    // Predicated region
    $region14: #{tpu_custom_call.1} parent=1 // pred_check
      _
    $region15: #{tpu_custom_call.1} parent=1 // pred_check_branch
      %52 = sbr.rel (0) target = $region17
    $region16: #{tpu_custom_call.1} parent=1 // pred_region
      %s54 = ssub.s32 1024, 1024
      %55 = vsyncadd [#allocation9], %s54
      %s56 = sshll.u32 [#allocation8], 4
      %s57 = int_to_ptr.vmem [resolvable:$true] %s56
      %62 = dma.hbm_to_vmem [thread:$0]  %s3, 1024, %s57, [#allocation9], 64, 64, 4
    $region17: #{tpu_custom_call.1} parent=1 // pred_fallthru
      _
    // Predicated region
    $region18: #{tpu_custom_call.1} parent=1 // pred_check
      _
    $region19: #{tpu_custom_call.1} parent=1 // pred_check_branch
      %64 = sbr.rel (0) target = $region21
    $region20: #{tpu_custom_call.1} parent=1 // pred_region
      _
    $region21: #{tpu_custom_call.1} parent=1 // pred_fallthru
      _
    // Predicated region
    $region22: #{tpu_custom_call.1} parent=1 // pred_check
      _
    $region23: #{tpu_custom_call.1} parent=1 // pred_check_branch
      %66 = sbr.rel (0) target = $region25
    $region24: #{tpu_custom_call.1} parent=1 // pred_region
      _
    $region25: #{tpu_custom_call.1} parent=1 // pred_fallthru
      _
    // Predicated region
    $region26: #{tpu_custom_call.1} parent=1 // pred_check
      _
    $region27: #{tpu_custom_call.1} parent=1 // pred_check_branch
      %68 = sbr.rel (0) target = $region29
    $region28: #{tpu_custom_call.1} parent=1 // pred_region
      _
    $region29: #{tpu_custom_call.1} parent=1 // pred_fallthru
      _
    // Predicated region
    $region30: #{tpu_custom_call.1} parent=1 // pred_check
      _
    $region31: #{tpu_custom_call.1} parent=1 // pred_check_branch
      %70 = sbr.rel (0) target = $region33
    $region32: #{tpu_custom_call.1} parent=1 // pred_region
      _
    $region33: #{tpu_custom_call.1} parent=1 // pred_fallthru
      _
    // Predicated region
    $region34: #{tpu_custom_call.1} parent=1 // pred_check
      _
    $region35: #{tpu_custom_call.1} parent=1 // pred_check_branch
      %72 = sbr.rel (0) target = $region37
    $region36: #{tpu_custom_call.1} parent=1 // pred_region
      %73 = dma.done [#allocation3], 64
    $region37: #{tpu_custom_call.1} parent=1 // pred_fallthru
      _
    // Predicated region
    $region38: #{tpu_custom_call.1} parent=1 // pred_check
      _
    $region39: #{tpu_custom_call.1} parent=1 // pred_check_branch
      %75 = sbr.rel (0) target = $region41
    $region40: #{tpu_custom_call.1} parent=1 // pred_region
      %76 = dma.done [#allocation6], 1024
    $region41: #{tpu_custom_call.1} parent=1 // pred_fallthru
      _
    // Predicated region
    $region42: #{tpu_custom_call.1} parent=1 // pred_check
      _
    $region43: #{tpu_custom_call.1} parent=1 // pred_check_branch
      %78 = sbr.rel (0) target = $region45
    $region44: #{tpu_custom_call.1} parent=1 // pred_region
      %79 = dma.done [#allocation6], 1024
    $region45: #{tpu_custom_call.1} parent=1 // pred_fallthru
      _
    // Predicated region
    $region46: #{tpu_custom_call.1} parent=1 // pred_check
      _
    $region47: #{tpu_custom_call.1} parent=1 // pred_check_branch
      %81 = sbr.rel (0) target = $region49
    $region48: #{tpu_custom_call.1} parent=1 // pred_region
      %82 = dma.done [#allocation9], 1024
    $region49: #{tpu_custom_call.1} parent=1 // pred_fallthru
      _
    %v84 = vld [vmem:[#allocation2] sm:$0xf]
    %v85 = vld [vmem:[#allocation5] sm:$0xf]
    %v86 = vld [vmem:[#allocation5 + $0x4] sm:$0xf]
    %v87 = vld [vmem:[#allocation5 + $0x8] sm:$0xf]
    %v88 = vld [vmem:[#allocation5 + $0xc] sm:$0xf]
    %v89 = vld [vmem:[#allocation5 + $0x10] sm:$0xf]
    %v90 = vld [vmem:[#allocation5 + $0x14] sm:$0xf]
    %v91 = vld [vmem:[#allocation5 + $0x18] sm:$0xf]
    %v92 = vld [vmem:[#allocation5 + $0x1c] sm:$0xf]
    %v93 = vld [vmem:[#allocation5 + $0x20] sm:$0xf]
    %v94 = vld [vmem:[#allocation5 + $0x24] sm:$0xf]
    %v95 = vld [vmem:[#allocation5 + $0x28] sm:$0xf]
    %v96 = vld [vmem:[#allocation5 + $0x2c] sm:$0xf]
    %v97 = vld [vmem:[#allocation5 + $0x30] sm:$0xf]
    %v98 = vld [vmem:[#allocation5 + $0x34] sm:$0xf]
    %v99 = vld [vmem:[#allocation5 + $0x38] sm:$0xf]
    %v100 = vld [vmem:[#allocation5 + $0x3c] sm:$0xf]
    %v117 = vunpack.c.l.b16 %v85
    %v118 = vunpack.c.l.b16 %v86
    %v119 = vunpack.c.l.b16 %v87
    %v120 = vunpack.c.l.b16 %v88
    %v121 = vunpack.c.l.b16 %v89
    %v122 = vunpack.c.l.b16 %v90
    %v123 = vunpack.c.l.b16 %v91
    %v124 = vunpack.c.l.b16 %v92
    %v125 = vunpack.c.l.b16 %v93
    %v126 = vunpack.c.l.b16 %v94
    %v127 = vunpack.c.l.b16 %v95
    %v128 = vunpack.c.l.b16 %v96
    %v129 = vunpack.c.l.b16 %v97
    %v130 = vunpack.c.l.b16 %v98
    %v131 = vunpack.c.l.b16 %v99
    %v132 = vunpack.c.l.b16 %v100
    %v133 = vpack.c.b16 %v118, %v117
    %v134 = vpack.c.b16 %v120, %v119
    %v135 = vpack.c.b16 %v122, %v121
    %v136 = vpack.c.b16 %v124, %v123
    %v137 = vpack.c.b16 %v126, %v125
    %v138 = vpack.c.b16 %v128, %v127
    %v139 = vpack.c.b16 %v130, %v129
    %v140 = vpack.c.b16 %v132, %v131
    %149 = vmatprep.subr.bf16.mxu0 0
    %150 = vmatpush1.bf16.msra.mxu0 %v133
    %151 = vmatprep.subr.bf16.mxu0 0
    %152 = vmatpush1.bf16.msra.mxu0 %v134
    %153 = vmatprep.subr.bf16.mxu0 0
    %154 = vmatpush1.bf16.msra.mxu0 %v135
    %155 = vmatprep.subr.bf16.mxu0 0
    %156 = vmatpush1.bf16.msra.mxu0 %v136
    %157 = vmatprep.subr.bf16.mxu0 0
    %158 = vmatpush1.bf16.msra.mxu0 %v137
    %159 = vmatprep.subr.bf16.mxu0 0
    %160 = vmatpush1.bf16.msra.mxu0 %v138
    %161 = vmatprep.subr.bf16.mxu0 0
    %162 = vmatpush1.bf16.msra.mxu0 %v139
    %163 = vmatprep.subr.bf16.mxu0 0
    %164 = vmatpush1.bf16.msra.mxu0 %v140
    %165 = vmatprep.subr.bf16.mxu0 0
    %166 = vmatpush1.bf16.msra.mxu0 0
    %167 = vmatprep.subr.bf16.mxu0 0
    %168 = vmatpush1.bf16.msra.mxu0 0
    %169 = vmatprep.subr.bf16.mxu0 0
    %170 = vmatpush1.bf16.msra.mxu0 0
    %171 = vmatprep.subr.bf16.mxu0 0
    %172 = vmatpush1.bf16.msra.mxu0 0
    %173 = vmatprep.subr.bf16.mxu0 0
    %174 = vmatpush1.bf16.msra.mxu0 0
    %175 = vmatprep.subr.bf16.mxu0 0
    %176 = vmatpush1.bf16.msra.mxu0 0
    %177 = vmatprep.subr.bf16.mxu0 0
    %178 = vmatpush1.bf16.msra.mxu0 0
    %179 = vmatprep.subr.bf16.mxu0 0
    %180 = vmatpush1.bf16.msra.mxu0 0
    %181 = vmatprep.mubr.bf16.mxu0 0
    %182 = vmatmul.mubr.bf16.gmra.mrb[0].mxu0 %v84
    %v183 = vpop.f32.mrb[0].mxu0
    %v184 = vadd.f32 0.0, %v183
    %v185 = vpop.f32.mrb[0].mxu0
    %v186 = vpop.f32.mrb[0].mxu0
    %v187 = vpop.f32.mrb[0].mxu0
    %188 = vdwg.mxu0
    %v189 = vrot.slane %v184, 4
    %v190 = vadd.f32 %v184, %v189
    %v191 = vrot.slane %v190, 2
    %v192 = vadd.f32 %v190, %v191
    %v193 = vrot.slane %v192, 1
    %v194 = vadd.f32 %v192, %v193
    %v195 = vrcp.pop 8.0
    %v196 = vmul.f32 %v194, %v195
    %v197 = vsub.f32 %v184, %v196
    %v198 = vmul.f32 %v197, %v197
    %v199 = vrot.slane %v198, 4
    %v200 = vadd.f32 %v198, %v199
    %v201 = vrot.slane %v200, 2
    %v202 = vadd.f32 %v200, %v201
    %v203 = vrot.slane %v202, 1
    %v204 = vadd.f32 %v202, %v203
    %v205 = vmul.f32 %v204, %v195
    %v206 = vadd.f32 %v205, 1e-05
    %v207 = vrsqrt.pop %v206
    %v208 = vmul.f32 %v197, %v207
    %v209 = vld [vmem:[%s4] sm:$0x1]
    %v211 = vlaneseq
    %v212 = vshrl.u32 %v211, 7
    %v213 = vsub.s32 0, %v212
    %v214 = vrot.slane %v209, %v213
    %v216 = vmul.f32 %v208, %v214
    %v217 = vld [vmem:[%s5] sm:$0x1]
    %v219 = vlaneseq
    %v220 = vshrl.u32 %v219, 7
    %v221 = vsub.s32 0, %v220
    %v222 = vrot.slane %v217, %v221
    %v224 = vadd.f32 %v216, %v222
    %v225 = vmax.f32 %v224, 0.0
    %v226 = vpack.c.bf16 %v225, %v225
    %v227 = vld [vmem:[#allocation7] sm:$0xf]
    %v228 = vld [vmem:[#allocation7 + $0x4] sm:$0xf]
    %v229 = vld [vmem:[#allocation7 + $0x8] sm:$0xf]
    %v230 = vld [vmem:[#allocation7 + $0xc] sm:$0xf]
    %v231 = vld [vmem:[#allocation7 + $0x10] sm:$0xf]
    %v232 = vld [vmem:[#allocation7 + $0x14] sm:$0xf]
    %v233 = vld [vmem:[#allocation7 + $0x18] sm:$0xf]
    %v234 = vld [vmem:[#allocation7 + $0x1c] sm:$0xf]
    %v235 = vld [vmem:[#allocation7 + $0x20] sm:$0xf]
    %v236 = vld [vmem:[#allocation7 + $0x24] sm:$0xf]
    %v237 = vld [vmem:[#allocation7 + $0x28] sm:$0xf]
    %v238 = vld [vmem:[#allocation7 + $0x2c] sm:$0xf]
    %v239 = vld [vmem:[#allocation7 + $0x30] sm:$0xf]
    %v240 = vld [vmem:[#allocation7 + $0x34] sm:$0xf]
    %v241 = vld [vmem:[#allocation7 + $0x38] sm:$0xf]
    %v242 = vld [vmem:[#allocation7 + $0x3c] sm:$0xf]
    %v259 = vunpack.c.l.b16 %v227
    %v260 = vunpack.c.l.b16 %v228
    %v261 = vunpack.c.l.b16 %v229
    %v262 = vunpack.c.l.b16 %v230
    %v263 = vunpack.c.l.b16 %v231
    %v264 = vunpack.c.l.b16 %v232
    %v265 = vunpack.c.l.b16 %v233
    %v266 = vunpack.c.l.b16 %v234
    %v267 = vunpack.c.l.b16 %v235
    %v268 = vunpack.c.l.b16 %v236
    %v269 = vunpack.c.l.b16 %v237
    %v270 = vunpack.c.l.b16 %v238
    %v271 = vunpack.c.l.b16 %v239
    %v272 = vunpack.c.l.b16 %v240
    %v273 = vunpack.c.l.b16 %v241
    %v274 = vunpack.c.l.b16 %v242
    %v275 = vpack.c.b16 %v260, %v259
    %v276 = vpack.c.b16 %v262, %v261
    %v277 = vpack.c.b16 %v264, %v263
    %v278 = vpack.c.b16 %v266, %v265
    %v279 = vpack.c.b16 %v268, %v267
    %v280 = vpack.c.b16 %v270, %v269
    %v281 = vpack.c.b16 %v272, %v271
    %v282 = vpack.c.b16 %v274, %v273
    %291 = vmatprep.subr.bf16.mxu0 0
    %292 = vmatpush1.bf16.msra.mxu0 %v275
    %293 = vmatprep.subr.bf16.mxu0 0
    %294 = vmatpush1.bf16.msra.mxu0 %v276
    %295 = vmatprep.subr.bf16.mxu0 0
    %296 = vmatpush1.bf16.msra.mxu0 %v277
    %297 = vmatprep.subr.bf16.mxu0 0
    %298 = vmatpush1.bf16.msra.mxu0 %v278
    %299 = vmatprep.subr.bf16.mxu0 0
    %300 = vmatpush1.bf16.msra.mxu0 %v279
    %301 = vmatprep.subr.bf16.mxu0 0
    %302 = vmatpush1.bf16.msra.mxu0 %v280
    %303 = vmatprep.subr.bf16.mxu0 0
    %304 = vmatpush1.bf16.msra.mxu0 %v281
    %305 = vmatprep.subr.bf16.mxu0 0
    %306 = vmatpush1.bf16.msra.mxu0 %v282
    %307 = vmatprep.subr.bf16.mxu0 0
    %308 = vmatpush1.bf16.msra.mxu0 0
    %309 = vmatprep.subr.bf16.mxu0 0
    %310 = vmatpush1.bf16.msra.mxu0 0
    %311 = vmatprep.subr.bf16.mxu0 0
    %312 = vmatpush1.bf16.msra.mxu0 0
    %313 = vmatprep.subr.bf16.mxu0 0
    %314 = vmatpush1.bf16.msra.mxu0 0
    %315 = vmatprep.subr.bf16.mxu0 0
    %316 = vmatpush1.bf16.msra.mxu0 0
    %317 = vmatprep.subr.bf16.mxu0 0
    %318 = vmatpush1.bf16.msra.mxu0 0
    %319 = vmatprep.subr.bf16.mxu0 0
    %320 = vmatpush1.bf16.msra.mxu0 0
    %321 = vmatprep.subr.bf16.mxu0 0
    %322 = vmatpush1.bf16.msra.mxu0 0
    %323 = vmatprep.mubr.bf16.mxu0 0
    %324 = vmatmul.mubr.bf16.gmra.mrb[0].mxu0 %v226
    %v325 = vpop.f32.mrb[0].mxu0
    %v326 = vadd.f32 0.0, %v325
    %v327 = vpop.f32.mrb[0].mxu0
    %v328 = vpop.f32.mrb[0].mxu0
    %v329 = vpop.f32.mrb[0].mxu0
    %330 = vdwg.mxu0
    %v331 = vrot.slane %v326, 4
    %v332 = vadd.f32 %v326, %v331
    %v333 = vrot.slane %v332, 2
    %v334 = vadd.f32 %v332, %v333
    %v335 = vrot.slane %v334, 1
    %v336 = vadd.f32 %v334, %v335
    %v337 = vmul.f32 %v336, %v195
    %v338 = vsub.f32 %v326, %v337
    %v339 = vmul.f32 %v338, %v338
    %v340 = vrot.slane %v339, 4
    %v341 = vadd.f32 %v339, %v340
    %v342 = vrot.slane %v341, 2
    %v343 = vadd.f32 %v341, %v342
    %v344 = vrot.slane %v343, 1
    %v345 = vadd.f32 %v343, %v344
    %v346 = vmul.f32 %v345, %v195
    %v347 = vadd.f32 %v346, 1e-05
    %v348 = vrsqrt.pop %v347
    %v349 = vmul.f32 %v338, %v348
    %v350 = vld [vmem:[%s6] sm:$0x1]
    %v352 = vlaneseq
    %v353 = vshrl.u32 %v352, 7
    %v354 = vsub.s32 0, %v353
    %v355 = vrot.slane %v350, %v354
    %v357 = vmul.f32 %v349, %v355
    %v358 = vld [vmem:[%s7] sm:$0x1]
    %v360 = vlaneseq
    %v361 = vshrl.u32 %v360, 7
    %v362 = vsub.s32 0, %v361
    %v363 = vrot.slane %v358, %v362
    %v365 = vadd.f32 %v357, %v363
    %v366 = vmax.f32 %v365, 0.0
    %v367 = vpack.c.bf16 %v366, %v366
    %v368 = vld [vmem:[#allocation8] sm:$0xf]
    %v369 = vld [vmem:[#allocation8 + $0x4] sm:$0xf]
    %v370 = vld [vmem:[#allocation8 + $0x8] sm:$0xf]
    %v371 = vld [vmem:[#allocation8 + $0xc] sm:$0xf]
    %v372 = vld [vmem:[#allocation8 + $0x10] sm:$0xf]
    %v373 = vld [vmem:[#allocation8 + $0x14] sm:$0xf]
    %v374 = vld [vmem:[#allocation8 + $0x18] sm:$0xf]
    %v375 = vld [vmem:[#allocation8 + $0x1c] sm:$0xf]
    %v376 = vld [vmem:[#allocation8 + $0x20] sm:$0xf]
    %v377 = vld [vmem:[#allocation8 + $0x24] sm:$0xf]
    %v378 = vld [vmem:[#allocation8 + $0x28] sm:$0xf]
    %v379 = vld [vmem:[#allocation8 + $0x2c] sm:$0xf]
    %v380 = vld [vmem:[#allocation8 + $0x30] sm:$0xf]
    %v381 = vld [vmem:[#allocation8 + $0x34] sm:$0xf]
    %v382 = vld [vmem:[#allocation8 + $0x38] sm:$0xf]
    %v383 = vld [vmem:[#allocation8 + $0x3c] sm:$0xf]
    %v400 = vunpack.c.l.b16 %v368
    %v401 = vunpack.c.l.b16 %v369
    %v402 = vunpack.c.l.b16 %v370
    %v403 = vunpack.c.l.b16 %v371
    %v404 = vunpack.c.l.b16 %v372
    %v405 = vunpack.c.l.b16 %v373
    %v406 = vunpack.c.l.b16 %v374
    %v407 = vunpack.c.l.b16 %v375
    %v408 = vunpack.c.l.b16 %v376
    %v409 = vunpack.c.l.b16 %v377
    %v410 = vunpack.c.l.b16 %v378
    %v411 = vunpack.c.l.b16 %v379
    %v412 = vunpack.c.l.b16 %v380
    %v413 = vunpack.c.l.b16 %v381
    %v414 = vunpack.c.l.b16 %v382
    %v415 = vunpack.c.l.b16 %v383
    %v416 = vpack.c.b16 %v401, %v400
    %v417 = vpack.c.b16 %v403, %v402
    %v418 = vpack.c.b16 %v405, %v404
    %v419 = vpack.c.b16 %v407, %v406
    %v420 = vpack.c.b16 %v409, %v408
    %v421 = vpack.c.b16 %v411, %v410
    %v422 = vpack.c.b16 %v413, %v412
    %v423 = vpack.c.b16 %v415, %v414
    %432 = vmatprep.subr.bf16.mxu0 0
    %433 = vmatpush1.bf16.msra.mxu0 %v416
    %434 = vmatprep.subr.bf16.mxu0 0
    %435 = vmatpush1.bf16.msra.mxu0 %v417
    %436 = vmatprep.subr.bf16.mxu0 0
    %437 = vmatpush1.bf16.msra.mxu0 %v418
    %438 = vmatprep.subr.bf16.mxu0 0
    %439 = vmatpush1.bf16.msra.mxu0 %v419
    %440 = vmatprep.subr.bf16.mxu0 0
    %441 = vmatpush1.bf16.msra.mxu0 %v420
    %442 = vmatprep.subr.bf16.mxu0 0
    %443 = vmatpush1.bf16.msra.mxu0 %v421
    %444 = vmatprep.subr.bf16.mxu0 0
    %445 = vmatpush1.bf16.msra.mxu0 %v422
    %446 = vmatprep.subr.bf16.mxu0 0
    %447 = vmatpush1.bf16.msra.mxu0 %v423
    %448 = vmatprep.subr.bf16.mxu0 0
    %449 = vmatpush1.bf16.msra.mxu0 0
    %450 = vmatprep.subr.bf16.mxu0 0
    %451 = vmatpush1.bf16.msra.mxu0 0
    %452 = vmatprep.subr.bf16.mxu0 0
    %453 = vmatpush1.bf16.msra.mxu0 0
    %454 = vmatprep.subr.bf16.mxu0 0
    %455 = vmatpush1.bf16.msra.mxu0 0
    %456 = vmatprep.subr.bf16.mxu0 0
    %457 = vmatpush1.bf16.msra.mxu0 0
    %458 = vmatprep.subr.bf16.mxu0 0
    %459 = vmatpush1.bf16.msra.mxu0 0
    %460 = vmatprep.subr.bf16.mxu0 0
    %461 = vmatpush1.bf16.msra.mxu0 0
    %462 = vmatprep.subr.bf16.mxu0 0
    %463 = vmatpush1.bf16.msra.mxu0 0
    %464 = vmatprep.mubr.bf16.mxu0 0
    %465 = vmatmul.mubr.bf16.gmra.mrb[0].mxu0 %v367
    %v466 = vpop.f32.mrb[0].mxu0
    %v467 = vadd.f32 0.0, %v466
    %v468 = vpop.f32.mrb[0].mxu0
    %v469 = vpop.f32.mrb[0].mxu0
    %v470 = vpop.f32.mrb[0].mxu0
    %471 = vdwg.mxu0
    %472 = vst [vmem:[#allocation10] sm:$0xff] %v467
    // Predicated region
    $region50: #{tpu_custom_call.1} parent=1 // pred_check
      _
    $region51: #{tpu_custom_call.1} parent=1 // pred_check_branch
      %474 = sbr.rel (0) target = $region53
    $region52: #{tpu_custom_call.1} parent=1 // pred_region
      %s476 = ssub.s32 128, 128
      %477 = vsyncadd [#allocation4], %s476
      %s479 = sshll.u32 [#allocation10], 4
      %s480 = int_to_ptr.vmem [resolvable:$true] %s479
      %482 = dma.vmem_to_hbm [thread:$0]  %s480, 128, %s8, [#allocation4]
    $region53: #{tpu_custom_call.1} parent=1 // pred_fallthru
      _
    // Predicated region
    $region54: #{tpu_custom_call.1} parent=1 // pred_check
      _
    $region55: #{tpu_custom_call.1} parent=1 // pred_check_branch
      %484 = sbr.rel (0) target = $region57
    $region56: #{tpu_custom_call.1} parent=1 // pred_region
      %485 = dma.done [#allocation4], 128
    $region57: #{tpu_custom_call.1} parent=1 // pred_fallthru
      _
    %486 = vsyncpa [#allocation3], 1
    %487 = vsyncpa [#allocation6], 1
    %488 = vsyncpa [#allocation9], 1
    %489 = vsyncpa [#allocation4], 1

</llo_original>
